<compile_context>
chip_gen: v5e
topology: v5e:2x2
jax: 0.10.0
libtpu: 0.0.40
codegen_flags: <defaults>
</compile_context>

<pallas_src>
import functools

import jax
import jax.numpy as jnp
from jax import lax
from jax.experimental import pallas as pl
from jax.experimental.pallas import tpu as pltpu


def pooler_kernel(x_ref, w_ref, b_ref, o_ref, acc_ref):
    """Grid = (N tiles, K tiles).  K is the contraction (reduction) axis.

    x_ref : (B_pad, tk)  activations for this K tile
    w_ref : (tn, tk)     torch-layout weight tile (H_out, H_in)
    b_ref : (1, tn)      bias tile
    o_ref : (B_pad, tn)  output tile (resident across the K axis)
    acc_ref: (B_pad, tn) f32 accumulator scratch
    """
    k = pl.program_id(1)

    @pl.when(k == 0)
    def _init():
        acc_ref[...] = jnp.zeros_like(acc_ref)

    # y[b, n] += sum_k x[b, k] * w[n, k]   (MXU handles the transposed RHS)
    acc_ref[...] += lax.dot_general(
        x_ref[...],
        w_ref[...],
        dimension_numbers=(((1,), (1,)), ((), ())),
        preferred_element_type=jnp.float32,
    )

    @pl.when(k == pl.num_programs(1) - 1)
    def _finalize():
        y = acc_ref[...] + b_ref[...].astype(jnp.float32)
        o_ref[...] = jnp.tanh(y).astype(o_ref.dtype)


def _pick_tile(dim, candidates=(512, 256, 128)):
    """Largest tile from `candidates` that divides `dim`, else the full dim."""
    for c in candidates:
        if dim % c == 0:
            return c
    return dim


@functools.partial(jax.jit, static_argnames=("compute_dtype",))
def pooler_forward(features, weight, bias, compute_dtype=None):
    """features: (B, S, H); weight: (H_out, H_in) torch layout; bias: (H_out,).

    compute_dtype: optional dtype (e.g. jnp.bfloat16) to stream x / W in — the
    matmul still accumulates in f32 and the bias+tanh epilogue is f32.
    """
    B, S, H = features.shape
    out_dtype = features.dtype

    # --- wrapper glue (cheap XLA ops, fused under jit) -----------------------
    x2d = features[:, 0, :]                      # CLS slice outside the kernel
    if compute_dtype is not None:
        x2d = x2d.astype(compute_dtype)
        weight = weight.astype(compute_dtype)
    b2 = bias.reshape(1, H)

    # Pad batch to a sublane multiple so stores are unmasked (8,128)-tiles.
    B_pad = max(8, ((B + 7) // 8) * 8)
    if B_pad != B:
        x2d = jnp.pad(x2d, ((0, B_pad - B), (0, 0)))

    # --- tiling --------------------------------------------------------------
    tn = _pick_tile(H)        # output-feature tile (lane-dense, multiple of 128 if possible)
    tk = _pick_tile(H)        # contraction tile
    grid = (pl.cdiv(H, tn), pl.cdiv(H, tk))

    out_padded = pl.pallas_call(
        pooler_kernel,
        out_shape=jax.ShapeDtypeStruct((B_pad, H), out_dtype),
        grid_spec=pltpu.PrefetchScalarGridSpec(
            num_scalar_prefetch=0,
            grid=grid,
            in_specs=[
                # activations: fixed rows, step over K
                pl.BlockSpec((B_pad, tk), lambda n, k: (0, k)),
                # torch-layout weight: (H_out, H_in) -> tile (n, k)
                pl.BlockSpec((tn, tk), lambda n, k: (n, k)),
                # bias: tile over N only
                pl.BlockSpec((1, tn), lambda n, k: (0, n)),
            ],
            # output tile fixed across K (accumulator pattern)
            out_specs=pl.BlockSpec((B_pad, tn), lambda n, k: (0, n)),
            scratch_shapes=[pltpu.VMEM((B_pad, tn), jnp.float32)],
        ),
        compiler_params=pltpu.CompilerParams(
            # N tiles are independent -> shard across TCs on v7x; K is a reduction.
            dimension_semantics=("parallel", "arbitrary"),
        ),
    )(x2d, weight, b2)

    return out_padded[:B]


if __name__ == "__main__":
    B, S, H = 2, 8, 32

    key = jax.random.PRNGKey(0)
    k_feat, k_w, k_b = jax.random.split(key, 3)

    features = jax.random.normal(k_feat, (B, S, H), dtype=jnp.float32)
    # torch Linear stores weight as (out_features, in_features)
    weight = jax.random.normal(k_w, (H, H), dtype=jnp.float32) * 0.05
    bias = jax.random.normal(k_b, (H,), dtype=jnp.float32) * 0.01

    # reference (same math as the PyTorch module, eval mode: dropout is a no-op)
    ref = jnp.tanh(features[:, 0, :] @ weight.T + bias)

    # f32 path: tight check
    out = pooler_forward(features, weight, bias)
    out = jax.block_until_ready(out)
    assert out.shape == (B, H)
    assert jnp.allclose(out, ref, atol=1e-5, rtol=1e-5)

    # bf16-streamed path (halves weight HBM traffic): loose check
    out_bf16 = pooler_forward(features, weight, bias, compute_dtype=jnp.bfloat16)
    out_bf16 = jax.block_until_ready(out_bf16)
    assert out_bf16.shape == (B, H)
    assert jnp.allclose(out_bf16, ref, atol=2e-2, rtol=2e-2)

    print("KERNEL_OK")
</pallas_src>

<mosaic_0001>
module attributes {stable_mosaic.version = 11 : i64} {
  func.func @pooler_kernel(%arg0: i32, %arg1: i32, %arg2: memref<8x32xf32, #tpu.memory_space<vmem>>, %arg3: memref<32x32xf32, #tpu.memory_space<vmem>>, %arg4: memref<1x32xf32, #tpu.memory_space<vmem>>, %arg5: memref<8x32xf32, #tpu.memory_space<vmem>>, %arg6: memref<8x32xf32, #tpu.memory_space<vmem>>) attributes {dimension_semantics = [#tpu.dimension_semantics<parallel>, #tpu.dimension_semantics<arbitrary>], iteration_bounds = array<i64: 1, 1>, scalar_prefetch = 0 : i64, scratch_operands = 1 : i64, tpu.core_type = #tpu.core_type<tc>, window_params = [{transform_indices = @transform_0, window_bounds = array<i64: 8, 32>}, {transform_indices = @transform_1, window_bounds = array<i64: 32, 32>}, {transform_indices = @transform_2, window_bounds = array<i64: 1, 32>}, {transform_indices = @transform_3, window_bounds = array<i64: 8, 32>}]} {
    %c0_i32 = arith.constant 0 : i32
    %0 = arith.cmpi eq, %arg1, %c0_i32 : i32
    %1 = arith.extui %0 : i1 to i32
    %c0_i32_0 = arith.constant 0 : i32
    %2 = arith.cmpi ne, %1, %c0_i32_0 : i32
    scf.if %2 {
      %cst_10 = arith.constant 0.000000e+00 : f32
      %12 = vector.broadcast %cst_10 : f32 to vector<8x32xf32>
      %c0_11 = arith.constant 0 : index
      %c0_12 = arith.constant 0 : index
      %13 = vector.load %arg6[%c0_11, %c0_12] : memref<8x32xf32, #tpu.memory_space<vmem>>, vector<8x32xf32>
      tpu.vector_store %arg6[%c0_11, %c0_12], %12 {strides = array<i32>} : memref<8x32xf32, #tpu.memory_space<vmem>>, vector<8x32xf32>,
    } else {
    }
    %c0 = arith.constant 0 : index
    %c0_1 = arith.constant 0 : index
    %3 = vector.load %arg6[%c0, %c0_1] : memref<8x32xf32, #tpu.memory_space<vmem>>, vector<8x32xf32>
    %c0_2 = arith.constant 0 : index
    %c0_3 = arith.constant 0 : index
    %4 = vector.load %arg2[%c0_2, %c0_3] : memref<8x32xf32, #tpu.memory_space<vmem>>, vector<8x32xf32>
    %c0_4 = arith.constant 0 : index
    %c0_5 = arith.constant 0 : index
    %5 = vector.load %arg3[%c0_4, %c0_5] : memref<32x32xf32, #tpu.memory_space<vmem>>, vector<32x32xf32>
    %cst = arith.constant dense<0.000000e+00> : vector<8x32xf32>
    %6 = tpu.matmul %4, %5, %cst {dimension_numbers = #tpu.dot_dimension_numbers<[1], [1], [0], [0], [0, 0, 1, 0], [], []>} : vector<8x32xf32>, vector<32x32xf32>, vector<8x32xf32> -> vector<8x32xf32>
    %7 = arith.addf %3, %6 : vector<8x32xf32>
    %c0_6 = arith.constant 0 : index
    %c0_7 = arith.constant 0 : index
    %8 = vector.load %arg6[%c0_6, %c0_7] : memref<8x32xf32, #tpu.memory_space<vmem>>, vector<8x32xf32>
    tpu.vector_store %arg6[%c0_6, %c0_7], %7 {strides = array<i32>} : memref<8x32xf32, #tpu.memory_space<vmem>>, vector<8x32xf32>,
    %c0_i32_8 = arith.constant 0 : i32
    %9 = arith.cmpi eq, %arg1, %c0_i32_8 : i32
    %10 = arith.extui %9 : i1 to i32
    %c0_i32_9 = arith.constant 0 : i32
    %11 = arith.cmpi ne, %10, %c0_i32_9 : i32
    scf.if %11 {
      %c0_10 = arith.constant 0 : index
      %c0_11 = arith.constant 0 : index
      %12 = vector.load %arg6[%c0_10, %c0_11] : memref<8x32xf32, #tpu.memory_space<vmem>>, vector<8x32xf32>
      %c0_12 = arith.constant 0 : index
      %c0_13 = arith.constant 0 : index
      %13 = vector.load %arg4[%c0_12, %c0_13] : memref<1x32xf32, #tpu.memory_space<vmem>>, vector<1x32xf32>
      %14 = vector.broadcast %13 : vector<1x32xf32> to vector<8x32xf32>
      %15 = arith.addf %12, %14 : vector<8x32xf32>
      %16 = math.tanh %15 : vector<8x32xf32>
      %c0_14 = arith.constant 0 : index
      %c0_15 = arith.constant 0 : index
      %17 = vector.load %arg5[%c0_14, %c0_15] : memref<8x32xf32, #tpu.memory_space<vmem>>, vector<8x32xf32>
      tpu.vector_store %arg5[%c0_14, %c0_15], %16 {strides = array<i32>} : memref<8x32xf32, #tpu.memory_space<vmem>>, vector<8x32xf32>,
    } else {
    }
    return
  }
  func.func @transform_0(%arg0: i32, %arg1: i32) -> (i32, i32) {
    %c0_i32 = arith.constant 0 : i32
    %c0_i32_0 = arith.constant 0 : i32
    return %c0_i32, %arg1 : i32, i32
  }
  func.func @transform_1(%arg0: i32, %arg1: i32) -> (i32, i32) {
    %c0_i32 = arith.constant 0 : i32
    return %arg0, %arg1 : i32, i32
  }
  func.func @transform_2(%arg0: i32, %arg1: i32) -> (i32, i32) {
    %c0_i32 = arith.constant 0 : i32
    %c0_i32_0 = arith.constant 0 : i32
    return %c0_i32, %arg0 : i32, i32
  }
  func.func @transform_3(%arg0: i32, %arg1: i32) -> (i32, i32) {
    %c0_i32 = arith.constant 0 : i32
    %c0_i32_0 = arith.constant 0 : i32
    return %c0_i32, %arg0 : i32, i32
  }
}

</mosaic_0001>

<llo_original>
// kernel: pooler_forward.1
$region0: #{pooler_forward.1}
  #allocation0 [shape = 'u32[]', space=smem, size = 0x4, offset = 0x4, fixed_abs, tag = 'smem constant byte address 0x4 - core index']
  #allocation1 [shape = 'u32[72,128]{1,0:T(1,128)}', space=vmem, size = 0x9000, scoped, tag = 'internal scratch']
  #allocation2 [shape = 'f32[8,32]{1,0:T(8,128)}', space=vmem, size = 0x1000, scoped, tag = 'scratch operand']
  %s0 = inlined_call_operand.vmem [shape: f32[8,32], index: 0, kind: input, shape index: {}]
  %s1 = inlined_call_operand.hbm [shape: f32[32,32], index: 1, kind: input, shape index: {}]
  %s2 = inlined_call_operand.vmem [shape: f32[1,32], index: 2, kind: input, shape index: {}]
  %s3 = inlined_call_operand.vmem [shape: f32[8,32], index: 3, kind: output, shape index: {}]
  %s4 = sld [smem:[#allocation0]]
  $region34: #{pooler_forward.1} parent=0
    _
  %s6 = ssub.s32 1, %s4
  %s7 = scalar_select 0, %s6, %s4
  $region1: #{pooler_forward.1} parent=0
    #allocation3 [shape = 'u8[16384]{0}', space=vmem, size = 0x4000, scoped, tag = 'input window, operand 1, single buffered']
    #allocation4 [shape = 's32[1]{0}', space=sflag, size = 0x4, scoped, tag = 'scoped memory for pooler_forward.1']
    %8 = vsyncpa [#allocation4], 0
    // Predicated region
    $region2: #{pooler_forward.1} parent=1 // pred_check
      _
    $region3: #{pooler_forward.1} parent=1 // pred_check_branch
      %10 = sbr.rel (0) target = $region5
    $region4: #{pooler_forward.1} parent=1 // pred_region
      _
    $region5: #{pooler_forward.1} parent=1 // pred_fallthru
      _
    // Predicated region
    $region6: #{pooler_forward.1} parent=1 // pred_check
      _
    $region7: #{pooler_forward.1} parent=1 // pred_check_branch
      %12 = sbr.rel (0) target = $region9
    $region8: #{pooler_forward.1} parent=1 // pred_region
      %14 = vsyncadd [#allocation4], 0
      %s15 = sshll.u32 %s1, 4
      %s16 = int_to_ptr.hbm [resolvable:$true] %s15
      %s17 = sshll.u32 [#allocation3], 4
      %s18 = int_to_ptr.vmem [resolvable:$true] %s17
      %23 = dma.hbm_to_vmem [thread:$0]  %s16, 512, %s18, [#allocation4], 128, 128, 8
    $region9: #{pooler_forward.1} parent=1 // pred_fallthru
      _
    // Predicated region
    $region10: #{pooler_forward.1} parent=1 // pred_check
      _
    $region11: #{pooler_forward.1} parent=1 // pred_check_branch
      %25 = sbr.rel (0) target = $region13
    $region12: #{pooler_forward.1} parent=1 // pred_region
      _
    $region13: #{pooler_forward.1} parent=1 // pred_fallthru
      _
    // Predicated region
    $region14: #{pooler_forward.1} parent=1 // pred_check
      _
    $region15: #{pooler_forward.1} parent=1 // pred_check_branch
      %27 = sbr.rel (0) target = $region17
    $region16: #{pooler_forward.1} parent=1 // pred_region
      %29 = dma.done [#allocation4], 512
    $region17: #{pooler_forward.1} parent=1 // pred_fallthru
      _
    %p30 = scmp.eq.s32.totalorder 0, 0
    // Predicated region
    $region18: #{pooler_forward.1} parent=1 // pred_check
      %p31 = pneg %p30
    $region19: #{pooler_forward.1} parent=1 // pred_check_branch
      %33 = sbr.rel (%p31) target = $region21
    $region20: #{pooler_forward.1} parent=1 // pred_region
      %vm34 = vcmask 261120
      %35 = vst.msk [vmem:[#allocation2] sm:$0xff] %vm34, 0.0
    $region21: #{pooler_forward.1} parent=1 // pred_fallthru
      _
    %v36 = vld [vmem:[#allocation2] sm:$0xff]
    %v37 = vld [vmem:[%s0] sm:$0xff]
    %v38 = vld [vmem:[#allocation3] sm:$0xff]
    %v39 = vld [vmem:[#allocation3 + $0x8] sm:$0xff]
    %v40 = vld [vmem:[#allocation3 + $0x10] sm:$0xff]
    %v41 = vld [vmem:[#allocation3 + $0x18] sm:$0xff]
    %vm42 = vcmask 261120
    %v44 = vsel %vm42, %v37, 0
    %v47 = vsel %vm42, %v38, 0
    %v50 = vsel %vm42, %v39, 0
    %v53 = vsel %vm42, %v40, 0
    %v56 = vsel %vm42, %v41, 0
    %58 = vmatpush.xpose.msra.mxu0 0.0
    %59 = vmatpush.xpose.msra.mxu0 0.0
    %60 = vmatpush.xpose.msra.mxu0 0.0
    %61 = vmatpush.xpose.msra.mxu0 0.0
    %62 = vmatpush.xpose.msra.mxu0 0.0
    %63 = vmatpush.xpose.msra.mxu0 0.0
    %64 = vmatpush.xpose.msra.mxu0 0.0
    %65 = vmatpush.xpose.msra.mxu0 0.0
    %66 = vmatpush.xpose.msra.mxu0 0.0
    %67 = vmatpush.xpose.msra.mxu0 0.0
    %68 = vmatpush.xpose.msra.mxu0 0.0
    %69 = vmatpush.xpose.msra.mxu0 0.0
    %70 = vmatpush.xpose.msra.mxu0 %v56
    %71 = vmatpush.xpose.msra.mxu0 %v53
    %72 = vmatpush.xpose.msra.mxu0 %v50
    %73 = vmatpush.xpose.msra.mxu0 %v47
    %74 = vmatmul.f32.gmra.mxu0 %v44
    %v75 = vpop.f32.mrf.mxu0
    %v76 = vadd.f32 0.0, %v75
    %77 = vdwg.mxu0
    %v78 = vadd.f32 %v36, %v76
    %79 = vst.msk [vmem:[#allocation2] sm:$0xff] %vm42, %v78
    // Predicated region
    $region22: #{pooler_forward.1} parent=1 // pred_check
      %p80 = pneg %p30
    $region23: #{pooler_forward.1} parent=1 // pred_check_branch
      %82 = sbr.rel (%p80) target = $region25
    $region24: #{pooler_forward.1} parent=1 // pred_region
      %v83 = vld [vmem:[#allocation2] sm:$0xff]
      %v84 = vld [vmem:[%s2] sm:$0x1]
      %v86 = vperm.slane %v84, 0
      %v88 = vadd.f32 %v83, %v86
      %v89 = vtanh.pop %v88
      %90 = vst.msk [vmem:[%s3] sm:$0xff] %vm42, %v89
    $region25: #{pooler_forward.1} parent=1 // pred_fallthru
      _
    // Predicated region
    $region26: #{pooler_forward.1} parent=1 // pred_check
      _
    $region27: #{pooler_forward.1} parent=1 // pred_check_branch
      %92 = sbr.rel (0) target = $region29
    $region28: #{pooler_forward.1} parent=1 // pred_region
      _
    $region29: #{pooler_forward.1} parent=1 // pred_fallthru
      _
    // Predicated region
    $region30: #{pooler_forward.1} parent=1 // pred_check
      _
    $region31: #{pooler_forward.1} parent=1 // pred_check_branch
      %94 = sbr.rel (0) target = $region33
    $region32: #{pooler_forward.1} parent=1 // pred_region
      _
    $region33: #{pooler_forward.1} parent=1 // pred_fallthru
      _
    %95 = vsyncpa [#allocation4], 1

</llo_original>
